<compile_context>
chip_gen: v5e
topology: v5e:2x2
jax: 0.10.0
libtpu: 0.0.40
codegen_flags: <defaults>
</compile_context>

<pallas_src>
import math
from functools import partial

import jax
import jax.numpy as jnp
from jax.experimental import pallas as pl
from jax.experimental.pallas import tpu as pltpu


def neighbor_encoder_kernel(
    h_ref,                      # (rows, F)  f32, rows = bblk * n
    wqkv_ref, bqkv_ref,         # (L, F, 3F) mm_dtype, (L, 1, 3F) f32
    w1_ref, b1_ref,             # (F, 4F)    mm_dtype, (1, 4F)   f32
    w2_ref, b2_ref,             # (4F, F)    mm_dtype, (1, F)    f32
    o_ref,                      # (rows, F)  f32
    *, num_layers: int, bblk: int, n: int, f: int, mm_dtype):
    rows = bblk * n
    x = h_ref[...]                                             # (rows, F) f32

    # --- stacked self-attention layers (static unroll, L is small) ---
    for l in range(num_layers):
        # Fused QKV projection: single (rows,F)@(F,3F) matmul, bias add in f32.
        # The 1/sqrt(2d) scale is already folded into the Q columns on the host.
        qkv = jnp.dot(x.astype(mm_dtype), wqkv_ref[l],
                      preferred_element_type=jnp.float32) + bqkv_ref[l]
        q = qkv[:, 0 * f:1 * f].reshape(bblk, n, f)
        k = qkv[:, 1 * f:2 * f].reshape(bblk, n, f)
        v = qkv[:, 2 * f:3 * f].reshape(bblk, n, f)

        # Scores as a batched contraction over the feature axis (no k.T materialized).
        s = jnp.einsum("bqd,bkd->bqk", q.astype(mm_dtype), k.astype(mm_dtype),
                       preferred_element_type=jnp.float32)     # (bblk, n, n)

        # Numerically-stable softmax in f32; reciprocal on the (otherwise idle) EUP.
        m = jnp.max(s, axis=-1, keepdims=True)
        p = jnp.exp(s - m)
        alpha = p * pl.reciprocal(jnp.sum(p, axis=-1, keepdims=True), approx=True)

        x = jnp.einsum("bqk,bkd->bqd", alpha.astype(mm_dtype), v.astype(mm_dtype),
                       preferred_element_type=jnp.float32).reshape(rows, f)

    # --- FC head: Linear(F,4F) -> ReLU -> Linear(4F,F) -> ReLU, row-wise on slab ---
    h1 = jnp.dot(x.astype(mm_dtype), w1_ref[...],
                 preferred_element_type=jnp.float32) + b1_ref[...]
    h1 = jnp.maximum(h1, 0.0)
    h2 = jnp.dot(h1.astype(mm_dtype), w2_ref[...],
                 preferred_element_type=jnp.float32) + b2_ref[...]
    h2 = jnp.maximum(h2, 0.0)

    # NOTE: output stays (rows, F=32).  Presenting a 128-lane-dense slab would need an
    # in-kernel sublane->lane relayout that costs more than the ~2 KiB masked-store
    # tail it would remove at these sizes.
    o_ref[...] = h2.astype(o_ref.dtype)


def _pack_params(params, F, mm_dtype):
    """Fuse Q/K/V, fold the 1/sqrt(F) score scale into Q, cast matmul weights."""
    inv_sqrt_f = 1.0 / math.sqrt(F)
    wq = params["wq"] * inv_sqrt_f
    bq = params["bq"] * inv_sqrt_f
    wqkv = jnp.concatenate([wq, params["wk"], params["wv"]], axis=-1)   # (L, F, 3F)
    bqkv = jnp.concatenate([bq, params["bk"], params["bv"]], axis=-1)   # (L, 3F)
    bqkv = bqkv[:, None, :]                                             # (L, 1, 3F)
    return (wqkv.astype(mm_dtype), bqkv.astype(jnp.float32),
            params["w1"].astype(mm_dtype), params["b1"].astype(jnp.float32),
            params["w2"].astype(mm_dtype), params["b2"].astype(jnp.float32))


def neighbor_encoder(H, params, *, num_layers: int, batch_block=None,
                     matmul_dtype=jnp.bfloat16):
    """H: (B, N, F) float32.  params: dict of stacked (in,out)-layout weights."""
    B, N, F = H.shape
    if batch_block is None:
        # Process the whole batch in one grid step (minimum pipeline overhead).
        # On v7x (2 TensorCores) with larger B, pass batch_block=pl.cdiv(B, 2)
        # (or smaller) so the "parallel" batch axis feeds both cores.
        batch_block = B
    assert B % batch_block == 0, "batch_block must divide B"
    grid = (B // batch_block,)
    rows = batch_block * N          # multiple of 8 whenever N % 8 == 0

    wqkv, bqkv, w1, b1, w2, b2 = _pack_params(params, F, matmul_dtype)

    # (B, N, F) and (B*N, F) are the same row-major bytes -> free relabeling in HBM.
    H_flat = H.reshape(B * N, F)

    full = lambda arr: pl.BlockSpec(arr.shape, lambda i, nd=arr.ndim: (0,) * nd)

    out_flat = pl.pallas_call(
        partial(neighbor_encoder_kernel, num_layers=num_layers,
                bblk=batch_block, n=N, f=F, mm_dtype=matmul_dtype),
        out_shape=jax.ShapeDtypeStruct((B * N, F), jnp.float32),
        grid_spec=pltpu.PrefetchScalarGridSpec(
            num_scalar_prefetch=0,
            grid=grid,
            in_specs=[
                pl.BlockSpec((rows, F), lambda i: (i, 0)),   # H slab
                full(wqkv), full(bqkv),                      # fused QKV
                full(w1), full(b1),                          # fc layer 1
                full(w2), full(b2),                          # fc layer 2
            ],
            out_specs=pl.BlockSpec((rows, F), lambda i: (i, 0)),
        ),
        compiler_params=pltpu.CompilerParams(
            dimension_semantics=("parallel",)),
    )(H_flat, wqkv, bqkv, w1, b1, w2, b2)
    return out_flat.reshape(B, N, F)


def init_params(key, d: int, num_layers: int):
    """Deterministic synthetic parameters (shapes match the PyTorch module)."""
    F = 2 * d
    ks = jax.random.split(key, 10)
    scale = 0.1
    return {
        # attention layers, stacked along leading axis L; weights in (in, out) layout
        "wq": scale * jax.random.normal(ks[0], (num_layers, F, F), jnp.float32),
        "bq": scale * jax.random.normal(ks[1], (num_layers, F), jnp.float32),
        "wk": scale * jax.random.normal(ks[2], (num_layers, F, F), jnp.float32),
        "bk": scale * jax.random.normal(ks[3], (num_layers, F), jnp.float32),
        "wv": scale * jax.random.normal(ks[4], (num_layers, F, F), jnp.float32),
        "bv": scale * jax.random.normal(ks[5], (num_layers, F), jnp.float32),
        # fc: Linear(F, 4F) -> ReLU -> Linear(4F, F) -> ReLU
        "w1": scale * jax.random.normal(ks[6], (F, 4 * F), jnp.float32),
        "b1": scale * jax.random.normal(ks[7], (1, 4 * F), jnp.float32),
        "w2": scale * jax.random.normal(ks[8], (4 * F, F), jnp.float32),
        "b2": scale * jax.random.normal(ks[9], (1, F), jnp.float32),
    }


def neighbor_encoder_ref(H, params, *, num_layers: int):
    """Pure-JAX f32 reference matching the PyTorch forward."""
    F = H.shape[-1]
    x = H
    for l in range(num_layers):
        q = x @ params["wq"][l] + params["bq"][l]
        k = x @ params["wk"][l] + params["bk"][l]
        v = x @ params["wv"][l] + params["bv"][l]
        s = jnp.einsum("bnd,bmd->bnm", q, k) / math.sqrt(F)
        alpha = jax.nn.softmax(s, axis=-1)
        x = jnp.einsum("bnm,bmd->bnd", alpha, v)
    h1 = jax.nn.relu(x @ params["w1"] + params["b1"][0])
    return jax.nn.relu(h1 @ params["w2"] + params["b2"][0])


if __name__ == "__main__":
    d = 16                 # F = 2*d = 32
    attention_num = 2
    B, N = 2, 8            # batch of 2, 8 neighbors each

    key = jax.random.PRNGKey(0)
    k_h, k_p = jax.random.split(key)
    H = jax.random.normal(k_h, (B, N, 2 * d), jnp.float32)
    params = init_params(k_p, d, attention_num)

    out = neighbor_encoder(H, params, num_layers=attention_num)
    out = jax.block_until_ready(out)

    ref = neighbor_encoder_ref(H, params, num_layers=attention_num)
    assert out.shape == (B, N, 2 * d)
    # bf16 MXU operands + approx EUP reciprocal => relaxed tolerance vs f32 reference.
    assert jnp.allclose(out, ref, atol=2e-2, rtol=2e-2), "mismatch vs reference"

    print("KERNEL_OK")
</pallas_src>

<mosaic_0001>
module attributes {stable_mosaic.version = 11 : i64} {
  func.func @neighbor_encoder_kernel(%arg0: i32, %arg1: memref<16x32xf32, #tpu.memory_space<vmem>>, %arg2: memref<2x32x96xbf16, #tpu.memory_space<vmem>>, %arg3: memref<2x1x96xf32, #tpu.memory_space<vmem>>, %arg4: memref<32x128xbf16, #tpu.memory_space<vmem>>, %arg5: memref<1x128xf32, #tpu.memory_space<vmem>>, %arg6: memref<128x32xbf16, #tpu.memory_space<vmem>>, %arg7: memref<1x32xf32, #tpu.memory_space<vmem>>, %arg8: memref<16x32xf32, #tpu.memory_space<vmem>>) attributes {dimension_semantics = [#tpu.dimension_semantics<parallel>], iteration_bounds = array<i64: 1>, scalar_prefetch = 0 : i64, scratch_operands = 0 : i64, tpu.core_type = #tpu.core_type<tc>, window_params = [{transform_indices = @transform_0, window_bounds = array<i64: 16, 32>}, {pipeline_mode = #tpu.pipeline_mode<synchronous>, transform_indices = @transform_1, window_bounds = array<i64: 2, 32, 96>}, {pipeline_mode = #tpu.pipeline_mode<synchronous>, transform_indices = @transform_2, window_bounds = array<i64: 2, 1, 96>}, {pipeline_mode = #tpu.pipeline_mode<synchronous>, transform_indices = @transform_3, window_bounds = array<i64: 32, 128>}, {pipeline_mode = #tpu.pipeline_mode<synchronous>, transform_indices = @transform_4, window_bounds = array<i64: 1, 128>}, {pipeline_mode = #tpu.pipeline_mode<synchronous>, transform_indices = @transform_5, window_bounds = array<i64: 128, 32>}, {pipeline_mode = #tpu.pipeline_mode<synchronous>, transform_indices = @transform_6, window_bounds = array<i64: 1, 32>}, {transform_indices = @transform_7, window_bounds = array<i64: 16, 32>}]} {
    %c0 = arith.constant 0 : index
    %c0_0 = arith.constant 0 : index
    %0 = vector.load %arg1[%c0, %c0_0] : memref<16x32xf32, #tpu.memory_space<vmem>>, vector<16x32xf32>
    %1 = arith.truncf %0 : vector<16x32xf32> to vector<16x32xbf16>
    %c0_1 = arith.constant 0 : index
    %c0_2 = arith.constant 0 : index
    %c0_3 = arith.constant 0 : index
    %2 = vector.load %arg2[%c0_1, %c0_2, %c0_3] : memref<2x32x96xbf16, #tpu.memory_space<vmem>>, vector<1x32x96xbf16>
    %3 = vector.shape_cast %2 : vector<1x32x96xbf16> to vector<32x96xbf16>
    %cst = arith.constant dense<0.000000e+00> : vector<16x96xf32>
    %4 = tpu.matmul %1, %3, %cst {dimension_numbers = #tpu.dot_dimension_numbers<[1], [0], [0], [1], [0, 0, 1, 1], [], []>} : vector<16x32xbf16>, vector<32x96xbf16>, vector<16x96xf32> -> vector<16x96xf32>
    %c0_4 = arith.constant 0 : index
    %c0_5 = arith.constant 0 : index
    %c0_6 = arith.constant 0 : index
    %5 = vector.load %arg3[%c0_4, %c0_5, %c0_6] : memref<2x1x96xf32, #tpu.memory_space<vmem>>, vector<1x1x96xf32>
    %6 = vector.shape_cast %5 : vector<1x1x96xf32> to vector<1x96xf32>
    %7 = vector.broadcast %6 : vector<1x96xf32> to vector<16x96xf32>
    %8 = arith.addf %4, %7 : vector<16x96xf32>
    %9 = vector.extract_strided_slice %8 {offsets = [0, 0], sizes = [16, 32], strides = [1, 1]} : vector<16x96xf32> to vector<16x32xf32>
    %10 = vector.shape_cast %9 : vector<16x32xf32> to vector<2x8x32xf32>
    %11 = vector.extract_strided_slice %8 {offsets = [0, 32], sizes = [16, 32], strides = [1, 1]} : vector<16x96xf32> to vector<16x32xf32>
    %12 = vector.shape_cast %11 : vector<16x32xf32> to vector<2x8x32xf32>
    %13 = vector.extract_strided_slice %8 {offsets = [0, 64], sizes = [16, 32], strides = [1, 1]} : vector<16x96xf32> to vector<16x32xf32>
    %14 = vector.shape_cast %13 : vector<16x32xf32> to vector<2x8x32xf32>
    %15 = arith.truncf %10 : vector<2x8x32xf32> to vector<2x8x32xbf16>
    %16 = arith.truncf %12 : vector<2x8x32xf32> to vector<2x8x32xbf16>
    "tpu.trace_start"() <{level = 10 : i32, message = "bqd,bkd->bqk"}> : () -> ()
    %cst_7 = arith.constant dense<0.000000e+00> : vector<2x8x8xf32>
    %17 = tpu.matmul %15, %16, %cst_7 {dimension_numbers = #tpu.dot_dimension_numbers<[2], [2], [1], [1], [0, 0, 0, 1, 1, 1], [0], [0]>} : vector<2x8x32xbf16>, vector<2x8x32xbf16>, vector<2x8x8xf32> -> vector<2x8x8xf32>
    "tpu.trace_stop"() : () -> ()
    %cst_8 = arith.constant dense<0xFF800000> : vector<2x8xf32>
    %18 = vector.multi_reduction <maximumf>, %17, %cst_8 [2] : vector<2x8x8xf32> to vector<2x8xf32>
    %19 = vector.shape_cast %18 : vector<2x8xf32> to vector<2x8x1xf32>
    %20 = vector.broadcast %19 : vector<2x8x1xf32> to vector<2x8x8xf32>
    %21 = arith.subf %17, %20 : vector<2x8x8xf32>
    %22 = math.exp %21 : vector<2x8x8xf32>
    %cst_9 = arith.constant dense<0.000000e+00> : vector<2x8xf32>
    %23 = vector.multi_reduction <add>, %22, %cst_9 [2] : vector<2x8x8xf32> to vector<2x8xf32>
    %24 = vector.shape_cast %23 : vector<2x8xf32> to vector<2x8x1xf32>
    %25 = tpu.reciprocal %24 {approx = true} : vector<2x8x1xf32> -> vector<2x8x1xf32>
    %26 = vector.broadcast %25 : vector<2x8x1xf32> to vector<2x8x8xf32>
    %27 = arith.mulf %22, %26 : vector<2x8x8xf32>
    %28 = arith.truncf %27 : vector<2x8x8xf32> to vector<2x8x8xbf16>
    %29 = arith.truncf %14 : vector<2x8x32xf32> to vector<2x8x32xbf16>
    "tpu.trace_start"() <{level = 10 : i32, message = "bqk,bkd->bqd"}> : () -> ()
    %cst_10 = arith.constant dense<0.000000e+00> : vector<2x8x32xf32>
    %30 = tpu.matmul %28, %29, %cst_10 {dimension_numbers = #tpu.dot_dimension_numbers<[2], [1], [1], [2], [0, 0, 0, 1, 1, 2], [0], [0]>} : vector<2x8x8xbf16>, vector<2x8x32xbf16>, vector<2x8x32xf32> -> vector<2x8x32xf32>
    "tpu.trace_stop"() : () -> ()
    %31 = vector.shape_cast %30 : vector<2x8x32xf32> to vector<16x32xf32>
    %32 = arith.truncf %31 : vector<16x32xf32> to vector<16x32xbf16>
    %c1 = arith.constant 1 : index
    %c0_11 = arith.constant 0 : index
    %c0_12 = arith.constant 0 : index
    %33 = vector.load %arg2[%c1, %c0_11, %c0_12] : memref<2x32x96xbf16, #tpu.memory_space<vmem>>, vector<1x32x96xbf16>
    %34 = vector.shape_cast %33 : vector<1x32x96xbf16> to vector<32x96xbf16>
    %cst_13 = arith.constant dense<0.000000e+00> : vector<16x96xf32>
    %35 = tpu.matmul %32, %34, %cst_13 {dimension_numbers = #tpu.dot_dimension_numbers<[1], [0], [0], [1], [0, 0, 1, 1], [], []>} : vector<16x32xbf16>, vector<32x96xbf16>, vector<16x96xf32> -> vector<16x96xf32>
    %c1_14 = arith.constant 1 : index
    %c0_15 = arith.constant 0 : index
    %c0_16 = arith.constant 0 : index
    %36 = vector.load %arg3[%c1_14, %c0_15, %c0_16] : memref<2x1x96xf32, #tpu.memory_space<vmem>>, vector<1x1x96xf32>
    %37 = vector.shape_cast %36 : vector<1x1x96xf32> to vector<1x96xf32>
    %38 = vector.broadcast %37 : vector<1x96xf32> to vector<16x96xf32>
    %39 = arith.addf %35, %38 : vector<16x96xf32>
    %40 = vector.extract_strided_slice %39 {offsets = [0, 0], sizes = [16, 32], strides = [1, 1]} : vector<16x96xf32> to vector<16x32xf32>
    %41 = vector.shape_cast %40 : vector<16x32xf32> to vector<2x8x32xf32>
    %42 = vector.extract_strided_slice %39 {offsets = [0, 32], sizes = [16, 32], strides = [1, 1]} : vector<16x96xf32> to vector<16x32xf32>
    %43 = vector.shape_cast %42 : vector<16x32xf32> to vector<2x8x32xf32>
    %44 = vector.extract_strided_slice %39 {offsets = [0, 64], sizes = [16, 32], strides = [1, 1]} : vector<16x96xf32> to vector<16x32xf32>
    %45 = vector.shape_cast %44 : vector<16x32xf32> to vector<2x8x32xf32>
    %46 = arith.truncf %41 : vector<2x8x32xf32> to vector<2x8x32xbf16>
    %47 = arith.truncf %43 : vector<2x8x32xf32> to vector<2x8x32xbf16>
    "tpu.trace_start"() <{level = 10 : i32, message = "bqd,bkd->bqk"}> : () -> ()
    %cst_17 = arith.constant dense<0.000000e+00> : vector<2x8x8xf32>
    %48 = tpu.matmul %46, %47, %cst_17 {dimension_numbers = #tpu.dot_dimension_numbers<[2], [2], [1], [1], [0, 0, 0, 1, 1, 1], [0], [0]>} : vector<2x8x32xbf16>, vector<2x8x32xbf16>, vector<2x8x8xf32> -> vector<2x8x8xf32>
    "tpu.trace_stop"() : () -> ()
    %cst_18 = arith.constant dense<0xFF800000> : vector<2x8xf32>
    %49 = vector.multi_reduction <maximumf>, %48, %cst_18 [2] : vector<2x8x8xf32> to vector<2x8xf32>
    %50 = vector.shape_cast %49 : vector<2x8xf32> to vector<2x8x1xf32>
    %51 = vector.broadcast %50 : vector<2x8x1xf32> to vector<2x8x8xf32>
    %52 = arith.subf %48, %51 : vector<2x8x8xf32>
    %53 = math.exp %52 : vector<2x8x8xf32>
    %cst_19 = arith.constant dense<0.000000e+00> : vector<2x8xf32>
    %54 = vector.multi_reduction <add>, %53, %cst_19 [2] : vector<2x8x8xf32> to vector<2x8xf32>
    %55 = vector.shape_cast %54 : vector<2x8xf32> to vector<2x8x1xf32>
    %56 = tpu.reciprocal %55 {approx = true} : vector<2x8x1xf32> -> vector<2x8x1xf32>
    %57 = vector.broadcast %56 : vector<2x8x1xf32> to vector<2x8x8xf32>
    %58 = arith.mulf %53, %57 : vector<2x8x8xf32>
    %59 = arith.truncf %58 : vector<2x8x8xf32> to vector<2x8x8xbf16>
    %60 = arith.truncf %45 : vector<2x8x32xf32> to vector<2x8x32xbf16>
    "tpu.trace_start"() <{level = 10 : i32, message = "bqk,bkd->bqd"}> : () -> ()
    %cst_20 = arith.constant dense<0.000000e+00> : vector<2x8x32xf32>
    %61 = tpu.matmul %59, %60, %cst_20 {dimension_numbers = #tpu.dot_dimension_numbers<[2], [1], [1], [2], [0, 0, 0, 1, 1, 2], [0], [0]>} : vector<2x8x8xbf16>, vector<2x8x32xbf16>, vector<2x8x32xf32> -> vector<2x8x32xf32>
    "tpu.trace_stop"() : () -> ()
    %62 = vector.shape_cast %61 : vector<2x8x32xf32> to vector<16x32xf32>
    %63 = arith.truncf %62 : vector<16x32xf32> to vector<16x32xbf16>
    %c0_21 = arith.constant 0 : index
    %c0_22 = arith.constant 0 : index
    %64 = vector.load %arg4[%c0_21, %c0_22] : memref<32x128xbf16, #tpu.memory_space<vmem>>, vector<32x128xbf16>
    %cst_23 = arith.constant dense<0.000000e+00> : vector<16x128xf32>
    %65 = tpu.matmul %63, %64, %cst_23 {dimension_numbers = #tpu.dot_dimension_numbers<[1], [0], [0], [1], [0, 0, 1, 1], [], []>} : vector<16x32xbf16>, vector<32x128xbf16>, vector<16x128xf32> -> vector<16x128xf32>
    %c0_24 = arith.constant 0 : index
    %c0_25 = arith.constant 0 : index
    %66 = vector.load %arg5[%c0_24, %c0_25] : memref<1x128xf32, #tpu.memory_space<vmem>>, vector<1x128xf32>
    %67 = vector.broadcast %66 : vector<1x128xf32> to vector<16x128xf32>
    %68 = arith.addf %65, %67 : vector<16x128xf32>
    %cst_26 = arith.constant 0.000000e+00 : f32
    %69 = vector.broadcast %cst_26 : f32 to vector<16x128xf32>
    %70 = arith.maximumf %68, %69 : vector<16x128xf32>
    %71 = arith.truncf %70 : vector<16x128xf32> to vector<16x128xbf16>
    %c0_27 = arith.constant 0 : index
    %c0_28 = arith.constant 0 : index
    %72 = vector.load %arg6[%c0_27, %c0_28] : memref<128x32xbf16, #tpu.memory_space<vmem>>, vector<128x32xbf16>
    %cst_29 = arith.constant dense<0.000000e+00> : vector<16x32xf32>
    %73 = tpu.matmul %71, %72, %cst_29 {dimension_numbers = #tpu.dot_dimension_numbers<[1], [0], [0], [1], [0, 0, 1, 1], [], []>} : vector<16x128xbf16>, vector<128x32xbf16>, vector<16x32xf32> -> vector<16x32xf32>
    %c0_30 = arith.constant 0 : index
    %c0_31 = arith.constant 0 : index
    %74 = vector.load %arg7[%c0_30, %c0_31] : memref<1x32xf32, #tpu.memory_space<vmem>>, vector<1x32xf32>
    %75 = vector.broadcast %74 : vector<1x32xf32> to vector<16x32xf32>
    %76 = arith.addf %73, %75 : vector<16x32xf32>
    %cst_32 = arith.constant 0.000000e+00 : f32
    %77 = vector.broadcast %cst_32 : f32 to vector<16x32xf32>
    %78 = arith.maximumf %76, %77 : vector<16x32xf32>
    %c0_33 = arith.constant 0 : index
    %c0_34 = arith.constant 0 : index
    %79 = vector.load %arg8[%c0_33, %c0_34] : memref<16x32xf32, #tpu.memory_space<vmem>>, vector<16x32xf32>
    tpu.vector_store %arg8[%c0_33, %c0_34], %78 {strides = array<i32>} : memref<16x32xf32, #tpu.memory_space<vmem>>, vector<16x32xf32>,
    return
  }
  func.func @transform_0(%arg0: i32) -> (i32, i32) {
    %c0_i32 = arith.constant 0 : i32
    %c0_i32_0 = arith.constant 0 : i32
    return %arg0, %c0_i32 : i32, i32
  }
  func.func @transform_1(%arg0: i32) -> (i32, i32, i32) {
    %c0_i32 = arith.constant 0 : i32
    %c0_i32_0 = arith.constant 0 : i32
    %c0_i32_1 = arith.constant 0 : i32
    %c0_i32_2 = arith.constant 0 : i32
    return %c0_i32, %c0_i32_0, %c0_i32_1 : i32, i32, i32
  }
  func.func @transform_2(%arg0: i32) -> (i32, i32, i32) {
    %c0_i32 = arith.constant 0 : i32
    %c0_i32_0 = arith.constant 0 : i32
    %c0_i32_1 = arith.constant 0 : i32
    %c0_i32_2 = arith.constant 0 : i32
    return %c0_i32, %c0_i32_0, %c0_i32_1 : i32, i32, i32
  }
  func.func @transform_3(%arg0: i32) -> (i32, i32) {
    %c0_i32 = arith.constant 0 : i32
    %c0_i32_0 = arith.constant 0 : i32
    %c0_i32_1 = arith.constant 0 : i32
    return %c0_i32, %c0_i32_0 : i32, i32
  }
  func.func @transform_4(%arg0: i32) -> (i32, i32) {
    %c0_i32 = arith.constant 0 : i32
    %c0_i32_0 = arith.constant 0 : i32
    %c0_i32_1 = arith.constant 0 : i32
    return %c0_i32, %c0_i32_0 : i32, i32
  }
  func.func @transform_5(%arg0: i32) -> (i32, i32) {
    %c0_i32 = arith.constant 0 : i32
    %c0_i32_0 = arith.constant 0 : i32
    %c0_i32_1 = arith.constant 0 : i32
    return %c0_i32, %c0_i32_0 : i32, i32
  }
  func.func @transform_6(%arg0: i32) -> (i32, i32) {
    %c0_i32 = arith.constant 0 : i32
    %c0_i32_0 = arith.constant 0 : i32
    %c0_i32_1 = arith.constant 0 : i32
    return %c0_i32, %c0_i32_0 : i32, i32
  }
  func.func @transform_7(%arg0: i32) -> (i32, i32) {
    %c0_i32 = arith.constant 0 : i32
    %c0_i32_0 = arith.constant 0 : i32
    return %arg0, %c0_i32 : i32, i32
  }
}

</mosaic_0001>

<llo_original>
// kernel: tpu_custom_call.1
$region0: #{tpu_custom_call.1}
  #allocation0 [shape = 'u32[]', space=smem, size = 0x4, offset = 0x4, fixed_abs, tag = 'smem constant byte address 0x4 - core index']
  #allocation1 [shape = 'u32[72,128]{1,0:T(1,128)}', space=vmem, size = 0x9000, scoped, tag = 'internal scratch']
  %s0 = inlined_call_operand.vmem [shape: f32[16,32], index: 0, kind: input, shape index: {}]
  %s1 = inlined_call_operand.vmem [shape: bf16[2,32,96], index: 1, kind: input, shape index: {}]
  %s2 = inlined_call_operand.vmem [shape: f32[2,1,96], index: 2, kind: input, shape index: {}]
  %s3 = inlined_call_operand.vmem [shape: bf16[32,128], index: 3, kind: input, shape index: {}]
  %s4 = inlined_call_operand.vmem [shape: f32[1,128], index: 4, kind: input, shape index: {}]
  %s5 = inlined_call_operand.vmem [shape: bf16[128,32], index: 5, kind: input, shape index: {}]
  %s6 = inlined_call_operand.vmem [shape: f32[1,32], index: 6, kind: input, shape index: {}]
  %s7 = inlined_call_operand.hbm [shape: f32[16,32], index: 7, kind: output, shape index: {}]
  %s8 = sld [smem:[#allocation0]]
  $region38: #{tpu_custom_call.1} parent=0
    _
  %s10 = ssub.s32 1, %s8
  %s11 = scalar_select 0, %s10, %s8
  $region1: #{tpu_custom_call.1} parent=0
    #allocation2 [shape = 'u8[8192]{0}', space=vmem, size = 0x2000, scoped, tag = 'output window, operand 0, single buffered']
    #allocation3 [shape = 's32[1]{0}', space=sflag, size = 0x4, scoped, tag = 'scoped memory for tpu_custom_call.1']
    %12 = vsyncpa [#allocation3], 0
    // Predicated region
    $region2: #{tpu_custom_call.1} parent=1 // pred_check
      _
    $region3: #{tpu_custom_call.1} parent=1 // pred_check_branch
      %14 = sbr.rel (0) target = $region5
    $region4: #{tpu_custom_call.1} parent=1 // pred_region
      _
    $region5: #{tpu_custom_call.1} parent=1 // pred_fallthru
      _
    // Predicated region
    $region6: #{tpu_custom_call.1} parent=1 // pred_check
      _
    $region7: #{tpu_custom_call.1} parent=1 // pred_check_branch
      %16 = sbr.rel (0) target = $region9
    $region8: #{tpu_custom_call.1} parent=1 // pred_region
      _
    $region9: #{tpu_custom_call.1} parent=1 // pred_fallthru
      _
    // Predicated region
    $region10: #{tpu_custom_call.1} parent=1 // pred_check
      _
    $region11: #{tpu_custom_call.1} parent=1 // pred_check_branch
      %18 = sbr.rel (0) target = $region13
    $region12: #{tpu_custom_call.1} parent=1 // pred_region
      _
    $region13: #{tpu_custom_call.1} parent=1 // pred_fallthru
      _
    // Predicated region
    $region14: #{tpu_custom_call.1} parent=1 // pred_check
      _
    $region15: #{tpu_custom_call.1} parent=1 // pred_check_branch
      %20 = sbr.rel (0) target = $region17
    $region16: #{tpu_custom_call.1} parent=1 // pred_region
      _
    $region17: #{tpu_custom_call.1} parent=1 // pred_fallthru
      _
    // Predicated region
    $region18: #{tpu_custom_call.1} parent=1 // pred_check
      _
    $region19: #{tpu_custom_call.1} parent=1 // pred_check_branch
      %22 = sbr.rel (0) target = $region21
    $region20: #{tpu_custom_call.1} parent=1 // pred_region
      _
    $region21: #{tpu_custom_call.1} parent=1 // pred_fallthru
      _
    // Predicated region
    $region22: #{tpu_custom_call.1} parent=1 // pred_check
      _
    $region23: #{tpu_custom_call.1} parent=1 // pred_check_branch
      %24 = sbr.rel (0) target = $region25
    $region24: #{tpu_custom_call.1} parent=1 // pred_region
      _
    $region25: #{tpu_custom_call.1} parent=1 // pred_fallthru
      _
    // Predicated region
    $region26: #{tpu_custom_call.1} parent=1 // pred_check
      _
    $region27: #{tpu_custom_call.1} parent=1 // pred_check_branch
      %26 = sbr.rel (0) target = $region29
    $region28: #{tpu_custom_call.1} parent=1 // pred_region
      _
    $region29: #{tpu_custom_call.1} parent=1 // pred_fallthru
      _
    %v28 = vld [vmem:[%s0] sm:$0xff]
    %v29 = vld [vmem:[%s0 + $0x8] sm:$0xff]
    %v30 = vpack.c.bf16 %v29, %v28
    %v31 = vld [vmem:[%s1] sm:$0xf]
    %v32 = vld [vmem:[%s1 + $0x4] sm:$0xf]
    %v33 = vld [vmem:[%s1 + $0x8] sm:$0xf]
    %v34 = vld [vmem:[%s1 + $0xc] sm:$0xf]
    %v35 = vld [vmem:[%s2] sm:$0x1]
    %v37 = vperm.slane %v35, 0
    %v43 = vunpack.c.l.b16 %v31
    %v44 = vunpack.c.l.b16 %v32
    %v45 = vunpack.c.l.b16 %v33
    %v46 = vunpack.c.l.b16 %v34
    %v47 = vpack.c.b16 %v44, %v43
    %v48 = vpack.c.b16 %v46, %v45
    %vm51 = vcmask 261120
    %v53 = vsel %vm51, %v30, 0
    %55 = vmatpush.bf16.msra.mxu0 0
    %56 = vmatpush.bf16.msra.mxu0 0
    %57 = vmatpush.bf16.msra.mxu0 0
    %58 = vmatpush.bf16.msra.mxu0 0
    %59 = vmatpush.bf16.msra.mxu0 0
    %60 = vmatpush.bf16.msra.mxu0 0
    %61 = vmatpush.bf16.msra.mxu0 %v48
    %62 = vmatpush.bf16.msra.mxu0 %v47
    %63 = vmatmul.bf16.gmra.mxu0 %v53
    %v64 = vpop.f32.mrf.mxu0
    %v65 = vadd.f32 %v37, %v64
    %v66 = vpop.f32.mrf.mxu0
    %v67 = vadd.f32 %v37, %v66
    %68 = vdwg.mxu0
    %v69 = vpack.c.bf16 %v65, %v65
    %v70 = vpack.c.bf16 %v67, %v67
    %v72 = vunpack.c.l.b16 %v69
    %v73 = vpack.c.b16 %v72, %v72
    %74 = vrot.lane.b32.xlu0 %v73, 96
    %v75 = vpop.permute.xlu0 %74
    %v77 = vsel %vm51, %v69, 0
    %v80 = vsel %vm51, %v75, 0
    %82 = vmatpush.bf16.xpose.msra.mxu0 0
    %83 = vmatpush.bf16.xpose.msra.mxu0 0
    %84 = vmatpush.bf16.xpose.msra.mxu0 0
    %85 = vmatpush.bf16.xpose.msra.mxu0 0
    %86 = vmatpush.bf16.xpose.msra.mxu0 0
    %87 = vmatpush.bf16.xpose.msra.mxu0 0
    %88 = vmatpush.bf16.xpose.msra.mxu0 0
    %89 = vmatpush.bf16.xpose.msra.mxu0 %v80
    %90 = vmatmul.bf16.gmra.mxu0 %v77
    %v91 = vpop.f32.mrf.mxu0
    %v92 = vadd.f32 0.0, %v91
    %v93 = vpop.f32.mrf.mxu0
    %94 = vdwg.mxu0
    %v96 = vunpack.c.l.b16 %v70
    %v97 = vpack.c.b16 %v96, %v96
    %98 = vrot.lane.b32.xlu0 %v97, 96
    %v99 = vpop.permute.xlu0 %98
    %v101 = vsel %vm51, %v70, 0
    %v104 = vsel %vm51, %v99, 0
    %106 = vmatpush.bf16.xpose.msra.mxu0 0
    %107 = vmatpush.bf16.xpose.msra.mxu0 0
    %108 = vmatpush.bf16.xpose.msra.mxu0 0
    %109 = vmatpush.bf16.xpose.msra.mxu0 0
    %110 = vmatpush.bf16.xpose.msra.mxu0 0
    %111 = vmatpush.bf16.xpose.msra.mxu0 0
    %112 = vmatpush.bf16.xpose.msra.mxu0 0
    %113 = vmatpush.bf16.xpose.msra.mxu0 %v104
    %114 = vmatmul.bf16.gmra.mxu0 %v101
    %v115 = vpop.f32.mrf.mxu0
    %v116 = vadd.f32 0.0, %v115
    %v117 = vpop.f32.mrf.mxu0
    %118 = vdwg.mxu0
    %vm119 = vcmask 64512
    %v120 = vsel %vm119, %v92, -inf
    %121 = vmax.xlane.f32.xlu0 %v120
    %v122 = vpop.xlane.xlu0 %121
    %v123 = vsel %vm119, %v116, -inf
    %124 = vmax.xlane.f32.xlu0 %v123
    %v125 = vpop.xlane.xlu0 %124
    %v126 = vsub.f32 %v92, %v122
    %v127 = vsub.f32 %v116, %v125
    %v128 = vmul.f32 %v126, 1.442695
    %v129 = vpow.pop %v128
    %v130 = vmul.f32 %v127, 1.442695
    %v131 = vpow.pop %v130
    %v132 = vsel %vm119, %v129, 0.0
    %133 = vadd.xlane.f32.xlu0 %v132
    %v134 = vpop.xlane.xlu0 %133
    %v135 = vsel %vm119, %v131, 0.0
    %136 = vadd.xlane.f32.xlu0 %v135
    %v137 = vpop.xlane.xlu0 %136
    %v138 = vrcp.pop %v134
    %v139 = vrcp.pop %v137
    %v140 = vmul.f32 %v129, %v138
    %v141 = vmul.f32 %v131, %v139
    %v142 = vpack.c.bf16 %v140, %v140
    %v143 = vpack.c.bf16 %v141, %v141
    %144 = vrot.lane.b32.xlu0 %v73, 64
    %v145 = vpop.permute.xlu0 %144
    %v147 = vsel %vm119, %v142, 0
    %vm149 = vcmask 1043456
    %v151 = vsel %vm149, %v145, 0
    %153 = vmatpush.bf16.msra.mxu0 0
    %154 = vmatpush.bf16.msra.mxu0 0
    %155 = vmatpush.bf16.msra.mxu0 0
    %156 = vmatpush.bf16.msra.mxu0 0
    %157 = vmatpush.bf16.msra.mxu0 0
    %158 = vmatpush.bf16.msra.mxu0 0
    %159 = vmatpush.bf16.msra.mxu0 0
    %160 = vmatpush.bf16.msra.mxu0 %v151
    %161 = vmatmul.bf16.gmra.mxu0 %v147
    %v162 = vpop.f32.mrf.mxu0
    %v163 = vadd.f32 0.0, %v162
    %v164 = vpop.f32.mrf.mxu0
    %165 = vdwg.mxu0
    %166 = vrot.lane.b32.xlu0 %v97, 64
    %v167 = vpop.permute.xlu0 %166
    %v169 = vsel %vm119, %v143, 0
    %v172 = vsel %vm149, %v167, 0
    %174 = vmatpush.bf16.msra.mxu0 0
    %175 = vmatpush.bf16.msra.mxu0 0
    %176 = vmatpush.bf16.msra.mxu0 0
    %177 = vmatpush.bf16.msra.mxu0 0
    %178 = vmatpush.bf16.msra.mxu0 0
    %179 = vmatpush.bf16.msra.mxu0 0
    %180 = vmatpush.bf16.msra.mxu0 0
    %181 = vmatpush.bf16.msra.mxu0 %v172
    %182 = vmatmul.bf16.gmra.mxu0 %v169
    %v183 = vpop.f32.mrf.mxu0
    %v184 = vadd.f32 0.0, %v183
    %v185 = vpop.f32.mrf.mxu0
    %186 = vdwg.mxu0
    %v187 = vpack.c.bf16 %v184, %v163
    %s188 = scalar_lea.vmem %s1, 16
    %v189 = vld [vmem:[%s188] sm:$0xf]
    %v190 = vld [vmem:[%s188 + $0x4] sm:$0xf]
    %v191 = vld [vmem:[%s188 + $0x8] sm:$0xf]
    %v192 = vld [vmem:[%s188 + $0xc] sm:$0xf]
    %s193 = scalar_lea.vmem %s2, 1
    %v194 = vld [vmem:[%s193] sm:$0x1]
    %v196 = vperm.slane %v194, 0
    %v202 = vunpack.c.l.b16 %v189
    %v203 = vunpack.c.l.b16 %v190
    %v204 = vunpack.c.l.b16 %v191
    %v205 = vunpack.c.l.b16 %v192
    %v206 = vpack.c.b16 %v203, %v202
    %v207 = vpack.c.b16 %v205, %v204
    %v211 = vsel %vm51, %v187, 0
    %213 = vmatpush.bf16.msra.mxu0 0
    %214 = vmatpush.bf16.msra.mxu0 0
    %215 = vmatpush.bf16.msra.mxu0 0
    %216 = vmatpush.bf16.msra.mxu0 0
    %217 = vmatpush.bf16.msra.mxu0 0
    %218 = vmatpush.bf16.msra.mxu0 0
    %219 = vmatpush.bf16.msra.mxu0 %v207
    %220 = vmatpush.bf16.msra.mxu0 %v206
    %221 = vmatmul.bf16.gmra.mxu0 %v211
    %v222 = vpop.f32.mrf.mxu0
    %v223 = vadd.f32 %v196, %v222
    %v224 = vpop.f32.mrf.mxu0
    %v225 = vadd.f32 %v196, %v224
    %226 = vdwg.mxu0
    %v227 = vpack.c.bf16 %v223, %v223
    %v228 = vpack.c.bf16 %v225, %v225
    %v230 = vunpack.c.l.b16 %v227
    %v231 = vpack.c.b16 %v230, %v230
    %232 = vrot.lane.b32.xlu0 %v231, 96
    %v233 = vpop.permute.xlu0 %232
    %v235 = vsel %vm51, %v227, 0
    %v238 = vsel %vm51, %v233, 0
    %240 = vmatpush.bf16.xpose.msra.mxu0 0
    %241 = vmatpush.bf16.xpose.msra.mxu0 0
    %242 = vmatpush.bf16.xpose.msra.mxu0 0
    %243 = vmatpush.bf16.xpose.msra.mxu0 0
    %244 = vmatpush.bf16.xpose.msra.mxu0 0
    %245 = vmatpush.bf16.xpose.msra.mxu0 0
    %246 = vmatpush.bf16.xpose.msra.mxu0 0
    %247 = vmatpush.bf16.xpose.msra.mxu0 %v238
    %248 = vmatmul.bf16.gmra.mxu0 %v235
    %v249 = vpop.f32.mrf.mxu0
    %v250 = vadd.f32 0.0, %v249
    %v251 = vpop.f32.mrf.mxu0
    %252 = vdwg.mxu0
    %v254 = vunpack.c.l.b16 %v228
    %v255 = vpack.c.b16 %v254, %v254
    %256 = vrot.lane.b32.xlu0 %v255, 96
    %v257 = vpop.permute.xlu0 %256
    %v259 = vsel %vm51, %v228, 0
    %v262 = vsel %vm51, %v257, 0
    %264 = vmatpush.bf16.xpose.msra.mxu0 0
    %265 = vmatpush.bf16.xpose.msra.mxu0 0
    %266 = vmatpush.bf16.xpose.msra.mxu0 0
    %267 = vmatpush.bf16.xpose.msra.mxu0 0
    %268 = vmatpush.bf16.xpose.msra.mxu0 0
    %269 = vmatpush.bf16.xpose.msra.mxu0 0
    %270 = vmatpush.bf16.xpose.msra.mxu0 0
    %271 = vmatpush.bf16.xpose.msra.mxu0 %v262
    %272 = vmatmul.bf16.gmra.mxu0 %v259
    %v273 = vpop.f32.mrf.mxu0
    %v274 = vadd.f32 0.0, %v273
    %v275 = vpop.f32.mrf.mxu0
    %276 = vdwg.mxu0
    %v277 = vsel %vm119, %v250, -inf
    %278 = vmax.xlane.f32.xlu0 %v277
    %v279 = vpop.xlane.xlu0 %278
    %v280 = vsel %vm119, %v274, -inf
    %281 = vmax.xlane.f32.xlu0 %v280
    %v282 = vpop.xlane.xlu0 %281
    %v283 = vsub.f32 %v250, %v279
    %v284 = vsub.f32 %v274, %v282
    %v285 = vmul.f32 %v283, 1.442695
    %v286 = vpow.pop %v285
    %v287 = vmul.f32 %v284, 1.442695
    %v288 = vpow.pop %v287
    %v289 = vsel %vm119, %v286, 0.0
    %290 = vadd.xlane.f32.xlu0 %v289
    %v291 = vpop.xlane.xlu0 %290
    %v292 = vsel %vm119, %v288, 0.0
    %293 = vadd.xlane.f32.xlu0 %v292
    %v294 = vpop.xlane.xlu0 %293
    %v295 = vrcp.pop %v291
    %v296 = vrcp.pop %v294
    %v297 = vmul.f32 %v286, %v295
    %v298 = vmul.f32 %v288, %v296
    %v299 = vpack.c.bf16 %v297, %v297
    %v300 = vpack.c.bf16 %v298, %v298
    %301 = vrot.lane.b32.xlu0 %v231, 64
    %v302 = vpop.permute.xlu0 %301
    %v304 = vsel %vm119, %v299, 0
    %v307 = vsel %vm149, %v302, 0
    %309 = vmatpush.bf16.msra.mxu0 0
    %310 = vmatpush.bf16.msra.mxu0 0
    %311 = vmatpush.bf16.msra.mxu0 0
    %312 = vmatpush.bf16.msra.mxu0 0
    %313 = vmatpush.bf16.msra.mxu0 0
    %314 = vmatpush.bf16.msra.mxu0 0
    %315 = vmatpush.bf16.msra.mxu0 0
    %316 = vmatpush.bf16.msra.mxu0 %v307
    %317 = vmatmul.bf16.gmra.mxu0 %v304
    %v318 = vpop.f32.mrf.mxu0
    %v319 = vadd.f32 0.0, %v318
    %v320 = vpop.f32.mrf.mxu0
    %321 = vdwg.mxu0
    %322 = vrot.lane.b32.xlu0 %v255, 64
    %v323 = vpop.permute.xlu0 %322
    %v325 = vsel %vm119, %v300, 0
    %v328 = vsel %vm149, %v323, 0
    %330 = vmatpush.bf16.msra.mxu0 0
    %331 = vmatpush.bf16.msra.mxu0 0
    %332 = vmatpush.bf16.msra.mxu0 0
    %333 = vmatpush.bf16.msra.mxu0 0
    %334 = vmatpush.bf16.msra.mxu0 0
    %335 = vmatpush.bf16.msra.mxu0 0
    %336 = vmatpush.bf16.msra.mxu0 0
    %337 = vmatpush.bf16.msra.mxu0 %v328
    %338 = vmatmul.bf16.gmra.mxu0 %v325
    %v339 = vpop.f32.mrf.mxu0
    %v340 = vadd.f32 0.0, %v339
    %v341 = vpop.f32.mrf.mxu0
    %342 = vdwg.mxu0
    %v343 = vpack.c.bf16 %v340, %v319
    %v344 = vld [vmem:[%s3] sm:$0xf]
    %v345 = vld [vmem:[%s3 + $0x4] sm:$0xf]
    %v346 = vld [vmem:[%s3 + $0x8] sm:$0xf]
    %v347 = vld [vmem:[%s3 + $0xc] sm:$0xf]
    %v348 = vld [vmem:[%s4] sm:$0x1]
    %v350 = vperm.slane %v348, 0
    %v356 = vunpack.c.l.b16 %v344
    %v357 = vunpack.c.l.b16 %v345
    %v358 = vunpack.c.l.b16 %v346
    %v359 = vunpack.c.l.b16 %v347
    %v360 = vpack.c.b16 %v357, %v356
    %v361 = vpack.c.b16 %v359, %v358
    %v365 = vsel %vm51, %v343, 0
    %367 = vmatpush.bf16.msra.mxu0 0
    %368 = vmatpush.bf16.msra.mxu0 0
    %369 = vmatpush.bf16.msra.mxu0 0
    %370 = vmatpush.bf16.msra.mxu0 0
    %371 = vmatpush.bf16.msra.mxu0 0
    %372 = vmatpush.bf16.msra.mxu0 0
    %373 = vmatpush.bf16.msra.mxu0 %v361
    %374 = vmatpush.bf16.msra.mxu0 %v360
    %375 = vmatmul.bf16.gmra.mxu0 %v365
    %v376 = vpop.f32.mrf.mxu0
    %v377 = vadd.f32 %v350, %v376
    %v378 = vpop.f32.mrf.mxu0
    %v379 = vadd.f32 %v350, %v378
    %380 = vdwg.mxu0
    %v381 = vmax.f32 %v377, 0.0
    %v382 = vmax.f32 %v379, 0.0
    %v383 = vpack.c.bf16 %v382, %v381
    %v384 = vld [vmem:[%s5] sm:$0xf]
    %v385 = vld [vmem:[%s5 + $0x4] sm:$0xf]
    %v386 = vld [vmem:[%s5 + $0x8] sm:$0xf]
    %v387 = vld [vmem:[%s5 + $0xc] sm:$0xf]
    %v388 = vld [vmem:[%s5 + $0x10] sm:$0xf]
    %v389 = vld [vmem:[%s5 + $0x14] sm:$0xf]
    %v390 = vld [vmem:[%s5 + $0x18] sm:$0xf]
    %v391 = vld [vmem:[%s5 + $0x1c] sm:$0xf]
    %v392 = vld [vmem:[%s5 + $0x20] sm:$0xf]
    %v393 = vld [vmem:[%s5 + $0x24] sm:$0xf]
    %v394 = vld [vmem:[%s5 + $0x28] sm:$0xf]
    %v395 = vld [vmem:[%s5 + $0x2c] sm:$0xf]
    %v396 = vld [vmem:[%s5 + $0x30] sm:$0xf]
    %v397 = vld [vmem:[%s5 + $0x34] sm:$0xf]
    %v398 = vld [vmem:[%s5 + $0x38] sm:$0xf]
    %v399 = vld [vmem:[%s5 + $0x3c] sm:$0xf]
    %v400 = vld [vmem:[%s6] sm:$0x1]
    %v402 = vperm.slane %v400, 0
    %v420 = vunpack.c.l.b16 %v384
    %v421 = vunpack.c.l.b16 %v385
    %v422 = vunpack.c.l.b16 %v386
    %v423 = vunpack.c.l.b16 %v387
    %v424 = vunpack.c.l.b16 %v388
    %v425 = vunpack.c.l.b16 %v389
    %v426 = vunpack.c.l.b16 %v390
    %v427 = vunpack.c.l.b16 %v391
    %v428 = vunpack.c.l.b16 %v392
    %v429 = vunpack.c.l.b16 %v393
    %v430 = vunpack.c.l.b16 %v394
    %v431 = vunpack.c.l.b16 %v395
    %v432 = vunpack.c.l.b16 %v396
    %v433 = vunpack.c.l.b16 %v397
    %v434 = vunpack.c.l.b16 %v398
    %v435 = vunpack.c.l.b16 %v399
    %v436 = vpack.c.b16 %v421, %v420
    %v437 = vpack.c.b16 %v423, %v422
    %v438 = vpack.c.b16 %v425, %v424
    %v439 = vpack.c.b16 %v427, %v426
    %v440 = vpack.c.b16 %v429, %v428
    %v441 = vpack.c.b16 %v431, %v430
    %v442 = vpack.c.b16 %v433, %v432
    %v443 = vpack.c.b16 %v435, %v434
    %452 = vmatpush.bf16.msra.mxu0 %v443
    %453 = vmatpush.bf16.msra.mxu0 %v442
    %454 = vmatpush.bf16.msra.mxu0 %v441
    %455 = vmatpush.bf16.msra.mxu0 %v440
    %456 = vmatpush.bf16.msra.mxu0 %v439
    %457 = vmatpush.bf16.msra.mxu0 %v438
    %458 = vmatpush.bf16.msra.mxu0 %v437
    %459 = vmatpush.bf16.msra.mxu0 %v436
    %460 = vmatmul.bf16.gmra.mxu0 %v383
    %v461 = vpop.f32.mrf.mxu0
    %v462 = vadd.f32 %v402, %v461
    %v463 = vpop.f32.mrf.mxu0
    %v464 = vadd.f32 %v402, %v463
    %465 = vdwg.mxu0
    %v466 = vmax.f32 %v462, 0.0
    %v467 = vmax.f32 %v464, 0.0
    %468 = vst.msk [vmem:[#allocation2] sm:$0xff] %vm51, %v466
    %469 = vst.msk [vmem:[#allocation2 + $0x8] sm:$0xff] %vm51, %v467
    // Predicated region
    $region30: #{tpu_custom_call.1} parent=1 // pred_check
      _
    $region31: #{tpu_custom_call.1} parent=1 // pred_check_branch
      %471 = sbr.rel (0) target = $region33
    $region32: #{tpu_custom_call.1} parent=1 // pred_region
      %473 = vsyncadd [#allocation3], 0
      %s474 = sshll.u32 [#allocation2], 4
      %s475 = int_to_ptr.vmem [resolvable:$true] %s474
      %s476 = sshll.u32 %s7, 4
      %s477 = int_to_ptr.hbm [resolvable:$true] %s476
      %482 = dma.vmem_to_hbm [thread:$0]  %s475, 256, %s477, [#allocation3], 128, 128, 8
    $region33: #{tpu_custom_call.1} parent=1 // pred_fallthru
      _
    // Predicated region
    $region34: #{tpu_custom_call.1} parent=1 // pred_check
      _
    $region35: #{tpu_custom_call.1} parent=1 // pred_check_branch
      %484 = sbr.rel (0) target = $region37
    $region36: #{tpu_custom_call.1} parent=1 // pred_region
      %486 = dma.done [#allocation3], 256
    $region37: #{tpu_custom_call.1} parent=1 // pred_fallthru
      _
    %487 = vsyncpa [#allocation3], 1

</llo_original>
